<compile_context>
chip_gen: v5e
topology: v5e:2x2
jax: 0.10.0
libtpu: 0.0.40
codegen_flags: <defaults>
</compile_context>

<pallas_src>
import functools
import math

import jax
import jax.numpy as jnp
from jax.experimental import pallas as pl
from jax.experimental.pallas import tpu as pltpu


_LEAKY_SLOPE = 0.01  # nn.LeakyReLU() default


def _leaky_relu(x, negative_slope=_LEAKY_SLOPE):
    return jnp.where(x > 0, x, negative_slope * x)


def _round_up(x, m):
    return -(-x // m) * m


def critic_head_kernel(ni_pad, ne_pad, ni, ne,
                       item_ref, ems_ref,
                       w1_ref, b1_ref,
                       w2_ref, b2_ref,
                       w3ai_ref, w3ae_ref, b3a_ref,
                       w3b_ref, b3b_ref,
                       w3c_ref, b3c_ref,
                       out_ref):
    """One batch tile of the CriticHead hot path."""
    rows_i, e = item_ref.shape
    tb = rows_i // ni_pad  # batch rows in this tile

    # layer_1 / layer_2: Linear + LeakyReLU.  Matmul inputs may be bf16; the
    # accumulation and the whole epilogue stay in f32 (v5e has no bf16 VPU).
    h1 = _leaky_relu(
        jnp.dot(item_ref[...], w1_ref[...], preferred_element_type=jnp.float32)
        + b1_ref[...])
    h2 = _leaky_relu(
        jnp.dot(ems_ref[...], w2_ref[...], preferred_element_type=jnp.float32)
        + b2_ref[...])

    # Per-batch sum over the sequence axis.  ni_pad/ne_pad are multiples of 8,
    # so the 3-D reshape is sublane-aligned (no relayout copy).
    item_sum = jnp.sum(h1.reshape(tb, ni_pad, e), axis=1)   # (tb, E)
    ems_sum = jnp.sum(h2.reshape(tb, ne_pad, e), axis=1)    # (tb, E)

    # Zero-padded sequence rows contribute exactly leaky_relu(bias) each —
    # subtract that exact constant instead of masking (static branch).
    if ni != ni_pad:
        item_sum = item_sum - (ni_pad - ni) * _leaky_relu(b1_ref[...])
    if ne != ne_pad:
        ems_sum = ems_sum - (ne_pad - ne) * _leaky_relu(b2_ref[...])

    # layer_3 first Linear(2E, E): the feature-dim concat is eliminated by
    # splitting the weight into its item / ems halves and accumulating both
    # partial matmuls into the same f32 result.
    h3 = _leaky_relu(
        jnp.dot(item_sum, w3ai_ref[...], preferred_element_type=jnp.float32)
        + jnp.dot(ems_sum, w3ae_ref[...], preferred_element_type=jnp.float32)
        + b3a_ref[...])
    h3 = _leaky_relu(
        jnp.dot(h3, w3b_ref[...], preferred_element_type=jnp.float32)
        + b3b_ref[...])

    # Final Linear(E, 1) as VPU multiply + lane reduction (no N=1 MXU matmul).
    value = jnp.sum(h3 * w3c_ref[...], axis=-1, keepdims=True) + b3c_ref[0, 0]

    # Lane-dense store: replicate across 128 lanes; wrapper slices [:, :1].
    out_ref[...] = jnp.broadcast_to(value, out_ref.shape).astype(out_ref.dtype)


def _pick_batch_tile(batch, ni_pad, ne_pad, embed, in_itemsize,
                     vmem_budget_bytes=8 * 1024 * 1024):
    """Largest divisor of `batch` with sublane-aligned blocks whose
    double-buffered streamed tiles fit a conservative (v7x-safe) VMEM budget."""
    def aligned(tb):
        # output block is (tb, 128): tb must be a multiple of 8 or the full batch
        return tb == batch or tb % 8 == 0

    def tile_bytes(tb):
        # 2x double buffering for the two streamed inputs + the f32 output tile
        return 2 * (tb * (ni_pad + ne_pad) * embed * in_itemsize + tb * 128 * 4)

    candidates = [tb for tb in range(1, batch + 1)
                  if batch % tb == 0 and aligned(tb)]
    fitting = [tb for tb in candidates if tile_bytes(tb) <= vmem_budget_bytes]
    return max(fitting) if fitting else min(candidates)


def critic_head_forward(item_emb, ems_emb, params, *,
                        compute_dtype=jnp.float32, batch_tile=None):
    """item_emb: (B, Ni, E), ems_emb: (B, Ne, E) -> state value (B, 1) f32.

    compute_dtype=jnp.bfloat16 halves HBM traffic for the embedding slabs and
    feeds the v6e/v7x MXU natively; accumulation/epilogue remain f32.
    """
    B, Ni, E = item_emb.shape
    _, Ne, _ = ems_emb.shape

    # Pad sequence dims to sublane multiples of 8 with zero rows (corrected
    # exactly inside the kernel).
    Ni_pad, Ne_pad = _round_up(Ni, 8), _round_up(Ne, 8)
    if Ni_pad != Ni:
        item_emb = jnp.pad(item_emb, ((0, 0), (0, Ni_pad - Ni), (0, 0)))
    if Ne_pad != Ne:
        ems_emb = jnp.pad(ems_emb, ((0, 0), (0, Ne_pad - Ne), (0, 0)))

    item2d = item_emb.reshape(B * Ni_pad, E).astype(compute_dtype)
    ems2d = ems_emb.reshape(B * Ne_pad, E).astype(compute_dtype)
    w1 = params['w1'].astype(compute_dtype)
    w2 = params['w2'].astype(compute_dtype)

    # Split layer_3's first weight to remove the in-kernel feature concat;
    # reshape the final (E,1) weight to a row for the VPU reduce.
    w3a_item = params['w3a'][:E]
    w3a_ems = params['w3a'][E:]
    w3c_row = params['w3c'].reshape(1, E)

    if batch_tile is None:
        TB = _pick_batch_tile(B, Ni_pad, Ne_pad, E,
                              jnp.dtype(compute_dtype).itemsize)
    else:
        TB = batch_tile
        if B % TB != 0 or not (TB == B or TB % 8 == 0):
            raise ValueError(f"invalid batch_tile={TB} for batch={B}")
    grid = (B // TB,)

    def stream_spec(rows_per_batch):
        return pl.BlockSpec((TB * rows_per_batch, E), lambda i: (i, 0))

    def resident_spec(shape):
        # constant index map -> fetched once, stays resident across grid steps
        return pl.BlockSpec(shape, lambda i: (0, 0))

    in_specs = [
        stream_spec(Ni_pad),                                 # item embeddings
        stream_spec(Ne_pad),                                 # ems embeddings
        resident_spec((E, E)), resident_spec((1, E)),        # w1, b1
        resident_spec((E, E)), resident_spec((1, E)),        # w2, b2
        resident_spec((E, E)), resident_spec((E, E)),        # w3a_item, w3a_ems
        resident_spec((1, E)),                               # b3a
        resident_spec((E, E)), resident_spec((1, E)),        # w3b, b3b
        resident_spec((1, E)),                               # w3c row
        pl.BlockSpec(memory_space=pltpu.MemorySpace.SMEM),   # b3c scalar
    ]
    out_spec = pl.BlockSpec((TB, 128), lambda i: (i, 0))     # lane-dense output

    kernel = functools.partial(critic_head_kernel, Ni_pad, Ne_pad, Ni, Ne)

    out = pl.pallas_call(
        kernel,
        out_shape=jax.ShapeDtypeStruct((B, 128), jnp.float32),
        grid=grid,
        in_specs=in_specs,
        out_specs=out_spec,
        compiler_params=pltpu.CompilerParams(
            dimension_semantics=("parallel",),       # v7x: 2 TCs share batch tiles
            vmem_limit_bytes=32 * 1024 * 1024),      # explicit; v7x 64 MiB safe
    )(item2d, ems2d,
      w1, params['b1'], w2, params['b2'],
      w3a_item, w3a_ems, params['b3a'],
      params['w3b'], params['b3b'],
      w3c_row, params['b3c'])

    return out[:, :1]


def init_params(key, embed_size):
    """Deterministic params matching CriticHead.__init__ shapes.

    PyTorch: orthogonal_(weight, gain=calculate_gain('leaky_relu')), bias=0.
    Weights are stored transposed as (in, out) for the kernel's x @ W + b.
    """
    E = embed_size
    gain = math.sqrt(2.0 / (1.0 + 0.01 ** 2))   # calculate_gain('leaky_relu')
    ortho = jax.nn.initializers.orthogonal(scale=gain)
    ks = jax.random.split(key, 5)
    return {
        'w1':  ortho(ks[0], (E, E), jnp.float32),
        'b1':  jnp.zeros((1, E), jnp.float32),
        'w2':  ortho(ks[1], (E, E), jnp.float32),
        'b2':  jnp.zeros((1, E), jnp.float32),
        'w3a': ortho(ks[2], (2 * E, E), jnp.float32),
        'b3a': jnp.zeros((1, E), jnp.float32),
        'w3b': ortho(ks[3], (E, E), jnp.float32),
        'b3b': jnp.zeros((1, E), jnp.float32),
        'w3c': ortho(ks[4], (E, 1), jnp.float32),
        'b3c': jnp.zeros((1, 1), jnp.float32),
    }


def critic_head_reference(item_emb, ems_emb, params):
    """Pure-JAX reference mirroring the PyTorch forward (padding_mask=False)."""
    h1 = _leaky_relu(item_emb @ params['w1'] + params['b1'])
    h2 = _leaky_relu(ems_emb @ params['w2'] + params['b2'])
    item_sum = jnp.sum(h1, axis=-2)
    ems_sum = jnp.sum(h2, axis=-2)
    joint = jnp.concatenate([item_sum, ems_sum], axis=-1)
    h3 = _leaky_relu(joint @ params['w3a'] + params['b3a'])
    h3 = _leaky_relu(h3 @ params['w3b'] + params['b3b'])
    # Linear(E, 1): mathematically identical to h3 @ w3c (written as a
    # multiply+reduce so the reference does not depend on MXU N=1 rounding).
    return jnp.sum(h3 * params['w3c'].reshape(1, -1),
                   axis=-1, keepdims=True) + params['b3c']


if __name__ == "__main__":
    key = jax.random.PRNGKey(0)
    k_item, k_ems, k_param, k_item2, k_ems2 = jax.random.split(key, 5)

    # Case 1: small shapes implied by the module (batch=2, k_placement=8, E=32).
    B, Ni, Ne, E = 2, 8, 8, 32
    item_emb = jax.random.normal(k_item, (B, Ni, E), jnp.float32)
    ems_emb = jax.random.normal(k_ems, (B, Ne, E), jnp.float32)
    params = init_params(k_param, E)

    out = jax.block_until_ready(critic_head_forward(item_emb, ems_emb, params))
    ref = critic_head_reference(item_emb, ems_emb, params)
    assert out.shape == (B, 1), out.shape
    assert jnp.allclose(out, ref, rtol=1e-3, atol=2e-3), (out, ref)

    # Case 2: larger batch, non-multiple-of-8 sequence lengths and an explicit
    # batch tile — exercises the grid, the padded-sequence correction and the
    # lane-dense output path.
    B2, Ni2, Ne2 = 16, 5, 7
    item_emb2 = jax.random.normal(k_item2, (B2, Ni2, E), jnp.float32)
    ems_emb2 = jax.random.normal(k_ems2, (B2, Ne2, E), jnp.float32)
    out2 = jax.block_until_ready(
        critic_head_forward(item_emb2, ems_emb2, params, batch_tile=8))
    ref2 = critic_head_reference(item_emb2, ems_emb2, params)
    assert out2.shape == (B2, 1), out2.shape
    assert jnp.allclose(out2, ref2, rtol=1e-3, atol=2e-3), (out2, ref2)

    # Case 3: bf16 matmul inputs (v6e/v7x fast path), f32 accumulation/epilogue.
    out_bf16 = jax.block_until_ready(
        critic_head_forward(item_emb, ems_emb, params,
                            compute_dtype=jnp.bfloat16))
    assert out_bf16.shape == (B, 1), out_bf16.shape
    assert jnp.allclose(out_bf16, ref, rtol=1e-1, atol=5e-1), (out_bf16, ref)

    print("KERNEL_OK")
</pallas_src>

<mosaic_0001>
module attributes {stable_mosaic.version = 11 : i64} {
  func.func @critic_head_kernel(%arg0: i32, %arg1: memref<16x32xf32, #tpu.memory_space<vmem>>, %arg2: memref<16x32xf32, #tpu.memory_space<vmem>>, %arg3: memref<32x32xf32, #tpu.memory_space<vmem>>, %arg4: memref<1x32xf32, #tpu.memory_space<vmem>>, %arg5: memref<32x32xf32, #tpu.memory_space<vmem>>, %arg6: memref<1x32xf32, #tpu.memory_space<vmem>>, %arg7: memref<32x32xf32, #tpu.memory_space<vmem>>, %arg8: memref<32x32xf32, #tpu.memory_space<vmem>>, %arg9: memref<1x32xf32, #tpu.memory_space<vmem>>, %arg10: memref<32x32xf32, #tpu.memory_space<vmem>>, %arg11: memref<1x32xf32, #tpu.memory_space<vmem>>, %arg12: memref<1x32xf32, #tpu.memory_space<vmem>>, %arg13: memref<1x1xf32, #tpu.memory_space<smem>>, %arg14: memref<2x128xf32, #tpu.memory_space<vmem>>) attributes {dimension_semantics = [#tpu.dimension_semantics<parallel>], iteration_bounds = array<i64: 1>, scalar_prefetch = 0 : i64, scratch_operands = 0 : i64, tpu.core_type = #tpu.core_type<tc>, window_params = [{transform_indices = @transform_0, window_bounds = array<i64: 16, 32>}, {transform_indices = @transform_1, window_bounds = array<i64: 16, 32>}, {pipeline_mode = #tpu.pipeline_mode<synchronous>, transform_indices = @transform_2, window_bounds = array<i64: 32, 32>}, {pipeline_mode = #tpu.pipeline_mode<synchronous>, transform_indices = @transform_3, window_bounds = array<i64: 1, 32>}, {pipeline_mode = #tpu.pipeline_mode<synchronous>, transform_indices = @transform_4, window_bounds = array<i64: 32, 32>}, {pipeline_mode = #tpu.pipeline_mode<synchronous>, transform_indices = @transform_5, window_bounds = array<i64: 1, 32>}, {pipeline_mode = #tpu.pipeline_mode<synchronous>, transform_indices = @transform_6, window_bounds = array<i64: 32, 32>}, {pipeline_mode = #tpu.pipeline_mode<synchronous>, transform_indices = @transform_7, window_bounds = array<i64: 32, 32>}, {pipeline_mode = #tpu.pipeline_mode<synchronous>, transform_indices = @transform_8, window_bounds = array<i64: 1, 32>}, {pipeline_mode = #tpu.pipeline_mode<synchronous>, transform_indices = @transform_9, window_bounds = array<i64: 32, 32>}, {pipeline_mode = #tpu.pipeline_mode<synchronous>, transform_indices = @transform_10, window_bounds = array<i64: 1, 32>}, {pipeline_mode = #tpu.pipeline_mode<synchronous>, transform_indices = @transform_11, window_bounds = array<i64: 1, 32>}, {transform_indices = @transform_12, window_bounds = array<i64: 1, 1>}, {transform_indices = @transform_13, window_bounds = array<i64: 2, 128>}]} {
    %c0 = arith.constant 0 : index
    %c0_0 = arith.constant 0 : index
    %0 = vector.load %arg1[%c0, %c0_0] : memref<16x32xf32, #tpu.memory_space<vmem>>, vector<16x32xf32>
    %c0_1 = arith.constant 0 : index
    %c0_2 = arith.constant 0 : index
    %1 = vector.load %arg3[%c0_1, %c0_2] : memref<32x32xf32, #tpu.memory_space<vmem>>, vector<32x32xf32>
    %cst = arith.constant dense<0.000000e+00> : vector<16x32xf32>
    %2 = tpu.matmul %0, %1, %cst {dimension_numbers = #tpu.dot_dimension_numbers<[1], [0], [0], [1], [0, 0, 1, 1], [], []>} : vector<16x32xf32>, vector<32x32xf32>, vector<16x32xf32> -> vector<16x32xf32>
    %c0_3 = arith.constant 0 : index
    %c0_4 = arith.constant 0 : index
    %3 = vector.load %arg4[%c0_3, %c0_4] : memref<1x32xf32, #tpu.memory_space<vmem>>, vector<1x32xf32>
    %4 = vector.broadcast %3 : vector<1x32xf32> to vector<16x32xf32>
    %5 = arith.addf %2, %4 : vector<16x32xf32>
    %cst_5 = arith.constant 0.000000e+00 : f32
    %6 = vector.broadcast %cst_5 : f32 to vector<16x32xf32>
    %7 = arith.cmpf ogt, %5, %6 : vector<16x32xf32>
    %cst_6 = arith.constant 0.00999999977 : f32
    %8 = vector.broadcast %cst_6 : f32 to vector<16x32xf32>
    %9 = arith.mulf %8, %5 : vector<16x32xf32>
    %10 = arith.select %7, %5, %9 : vector<16x32xi1>, vector<16x32xf32>
    %c0_7 = arith.constant 0 : index
    %c0_8 = arith.constant 0 : index
    %11 = vector.load %arg2[%c0_7, %c0_8] : memref<16x32xf32, #tpu.memory_space<vmem>>, vector<16x32xf32>
    %c0_9 = arith.constant 0 : index
    %c0_10 = arith.constant 0 : index
    %12 = vector.load %arg5[%c0_9, %c0_10] : memref<32x32xf32, #tpu.memory_space<vmem>>, vector<32x32xf32>
    %cst_11 = arith.constant dense<0.000000e+00> : vector<16x32xf32>
    %13 = tpu.matmul %11, %12, %cst_11 {dimension_numbers = #tpu.dot_dimension_numbers<[1], [0], [0], [1], [0, 0, 1, 1], [], []>} : vector<16x32xf32>, vector<32x32xf32>, vector<16x32xf32> -> vector<16x32xf32>
    %c0_12 = arith.constant 0 : index
    %c0_13 = arith.constant 0 : index
    %14 = vector.load %arg6[%c0_12, %c0_13] : memref<1x32xf32, #tpu.memory_space<vmem>>, vector<1x32xf32>
    %15 = vector.broadcast %14 : vector<1x32xf32> to vector<16x32xf32>
    %16 = arith.addf %13, %15 : vector<16x32xf32>
    %cst_14 = arith.constant 0.000000e+00 : f32
    %17 = vector.broadcast %cst_14 : f32 to vector<16x32xf32>
    %18 = arith.cmpf ogt, %16, %17 : vector<16x32xf32>
    %cst_15 = arith.constant 0.00999999977 : f32
    %19 = vector.broadcast %cst_15 : f32 to vector<16x32xf32>
    %20 = arith.mulf %19, %16 : vector<16x32xf32>
    %21 = arith.select %18, %16, %20 : vector<16x32xi1>, vector<16x32xf32>
    %22 = vector.shape_cast %10 : vector<16x32xf32> to vector<2x8x32xf32>
    %cst_16 = arith.constant dense<0.000000e+00> : vector<2x32xf32>
    %23 = vector.multi_reduction <add>, %22, %cst_16 [1] : vector<2x8x32xf32> to vector<2x32xf32>
    %24 = vector.shape_cast %21 : vector<16x32xf32> to vector<2x8x32xf32>
    %cst_17 = arith.constant dense<0.000000e+00> : vector<2x32xf32>
    %25 = vector.multi_reduction <add>, %24, %cst_17 [1] : vector<2x8x32xf32> to vector<2x32xf32>
    %c0_18 = arith.constant 0 : index
    %c0_19 = arith.constant 0 : index
    %26 = vector.load %arg7[%c0_18, %c0_19] : memref<32x32xf32, #tpu.memory_space<vmem>>, vector<32x32xf32>
    %cst_20 = arith.constant dense<0.000000e+00> : vector<2x32xf32>
    %27 = tpu.matmul %23, %26, %cst_20 {dimension_numbers = #tpu.dot_dimension_numbers<[1], [0], [0], [1], [0, 0, 1, 1], [], []>} : vector<2x32xf32>, vector<32x32xf32>, vector<2x32xf32> -> vector<2x32xf32>
    %c0_21 = arith.constant 0 : index
    %c0_22 = arith.constant 0 : index
    %28 = vector.load %arg8[%c0_21, %c0_22] : memref<32x32xf32, #tpu.memory_space<vmem>>, vector<32x32xf32>
    %cst_23 = arith.constant dense<0.000000e+00> : vector<2x32xf32>
    %29 = tpu.matmul %25, %28, %cst_23 {dimension_numbers = #tpu.dot_dimension_numbers<[1], [0], [0], [1], [0, 0, 1, 1], [], []>} : vector<2x32xf32>, vector<32x32xf32>, vector<2x32xf32> -> vector<2x32xf32>
    %30 = arith.addf %27, %29 : vector<2x32xf32>
    %c0_24 = arith.constant 0 : index
    %c0_25 = arith.constant 0 : index
    %31 = vector.load %arg9[%c0_24, %c0_25] : memref<1x32xf32, #tpu.memory_space<vmem>>, vector<1x32xf32>
    %32 = vector.broadcast %31 : vector<1x32xf32> to vector<2x32xf32>
    %33 = arith.addf %30, %32 : vector<2x32xf32>
    %cst_26 = arith.constant 0.000000e+00 : f32
    %34 = vector.broadcast %cst_26 : f32 to vector<2x32xf32>
    %35 = arith.cmpf ogt, %33, %34 : vector<2x32xf32>
    %cst_27 = arith.constant 0.00999999977 : f32
    %36 = vector.broadcast %cst_27 : f32 to vector<2x32xf32>
    %37 = arith.mulf %36, %33 : vector<2x32xf32>
    %38 = arith.select %35, %33, %37 : vector<2x32xi1>, vector<2x32xf32>
    %c0_28 = arith.constant 0 : index
    %c0_29 = arith.constant 0 : index
    %39 = vector.load %arg10[%c0_28, %c0_29] : memref<32x32xf32, #tpu.memory_space<vmem>>, vector<32x32xf32>
    %cst_30 = arith.constant dense<0.000000e+00> : vector<2x32xf32>
    %40 = tpu.matmul %38, %39, %cst_30 {dimension_numbers = #tpu.dot_dimension_numbers<[1], [0], [0], [1], [0, 0, 1, 1], [], []>} : vector<2x32xf32>, vector<32x32xf32>, vector<2x32xf32> -> vector<2x32xf32>
    %c0_31 = arith.constant 0 : index
    %c0_32 = arith.constant 0 : index
    %41 = vector.load %arg11[%c0_31, %c0_32] : memref<1x32xf32, #tpu.memory_space<vmem>>, vector<1x32xf32>
    %42 = vector.broadcast %41 : vector<1x32xf32> to vector<2x32xf32>
    %43 = arith.addf %40, %42 : vector<2x32xf32>
    %cst_33 = arith.constant 0.000000e+00 : f32
    %44 = vector.broadcast %cst_33 : f32 to vector<2x32xf32>
    %45 = arith.cmpf ogt, %43, %44 : vector<2x32xf32>
    %cst_34 = arith.constant 0.00999999977 : f32
    %46 = vector.broadcast %cst_34 : f32 to vector<2x32xf32>
    %47 = arith.mulf %46, %43 : vector<2x32xf32>
    %48 = arith.select %45, %43, %47 : vector<2x32xi1>, vector<2x32xf32>
    %c0_35 = arith.constant 0 : index
    %c0_36 = arith.constant 0 : index
    %49 = vector.load %arg12[%c0_35, %c0_36] : memref<1x32xf32, #tpu.memory_space<vmem>>, vector<1x32xf32>
    %50 = vector.broadcast %49 : vector<1x32xf32> to vector<2x32xf32>
    %51 = arith.mulf %48, %50 : vector<2x32xf32>
    %cst_37 = arith.constant dense<0.000000e+00> : vector<2xf32>
    %52 = vector.multi_reduction <add>, %51, %cst_37 [1] : vector<2x32xf32> to vector<2xf32>
    %53 = vector.shape_cast %52 : vector<2xf32> to vector<2x1xf32>
    %c0_38 = arith.constant 0 : index
    %c0_39 = arith.constant 0 : index
    %54 = memref.load %arg13[%c0_38, %c0_39] : memref<1x1xf32, #tpu.memory_space<smem>>
    %55 = vector.broadcast %54 : f32 to vector<2x1xf32>
    %56 = arith.addf %53, %55 : vector<2x1xf32>
    %57 = vector.shape_cast %56 : vector<2x1xf32> to vector<2x1xf32>
    %58 = vector.broadcast %57 : vector<2x1xf32> to vector<2x128xf32>
    %c0_40 = arith.constant 0 : index
    %c0_41 = arith.constant 0 : index
    %59 = vector.load %arg14[%c0_40, %c0_41] : memref<2x128xf32, #tpu.memory_space<vmem>>, vector<2x128xf32>
    tpu.vector_store %arg14[%c0_40, %c0_41], %58 {strides = array<i32>} : memref<2x128xf32, #tpu.memory_space<vmem>>, vector<2x128xf32>,
    return
  }
  func.func @transform_0(%arg0: i32) -> (i32, i32) {
    %c0_i32 = arith.constant 0 : i32
    %c0_i32_0 = arith.constant 0 : i32
    return %arg0, %c0_i32 : i32, i32
  }
  func.func @transform_1(%arg0: i32) -> (i32, i32) {
    %c0_i32 = arith.constant 0 : i32
    %c0_i32_0 = arith.constant 0 : i32
    return %arg0, %c0_i32 : i32, i32
  }
  func.func @transform_2(%arg0: i32) -> (i32, i32) {
    %c0_i32 = arith.constant 0 : i32
    %c0_i32_0 = arith.constant 0 : i32
    %c0_i32_1 = arith.constant 0 : i32
    return %c0_i32, %c0_i32_0 : i32, i32
  }
  func.func @transform_3(%arg0: i32) -> (i32, i32) {
    %c0_i32 = arith.constant 0 : i32
    %c0_i32_0 = arith.constant 0 : i32
    %c0_i32_1 = arith.constant 0 : i32
    return %c0_i32, %c0_i32_0 : i32, i32
  }
  func.func @transform_4(%arg0: i32) -> (i32, i32) {
    %c0_i32 = arith.constant 0 : i32
    %c0_i32_0 = arith.constant 0 : i32
    %c0_i32_1 = arith.constant 0 : i32
    return %c0_i32, %c0_i32_0 : i32, i32
  }
  func.func @transform_5(%arg0: i32) -> (i32, i32) {
    %c0_i32 = arith.constant 0 : i32
    %c0_i32_0 = arith.constant 0 : i32
    %c0_i32_1 = arith.constant 0 : i32
    return %c0_i32, %c0_i32_0 : i32, i32
  }
  func.func @transform_6(%arg0: i32) -> (i32, i32) {
    %c0_i32 = arith.constant 0 : i32
    %c0_i32_0 = arith.constant 0 : i32
    %c0_i32_1 = arith.constant 0 : i32
    return %c0_i32, %c0_i32_0 : i32, i32
  }
  func.func @transform_7(%arg0: i32) -> (i32, i32) {
    %c0_i32 = arith.constant 0 : i32
    %c0_i32_0 = arith.constant 0 : i32
    %c0_i32_1 = arith.constant 0 : i32
    return %c0_i32, %c0_i32_0 : i32, i32
  }
  func.func @transform_8(%arg0: i32) -> (i32, i32) {
    %c0_i32 = arith.constant 0 : i32
    %c0_i32_0 = arith.constant 0 : i32
    %c0_i32_1 = arith.constant 0 : i32
    return %c0_i32, %c0_i32_0 : i32, i32
  }
  func.func @transform_9(%arg0: i32) -> (i32, i32) {
    %c0_i32 = arith.constant 0 : i32
    %c0_i32_0 = arith.constant 0 : i32
    %c0_i32_1 = arith.constant 0 : i32
    return %c0_i32, %c0_i32_0 : i32, i32
  }
  func.func @transform_10(%arg0: i32) -> (i32, i32) {
    %c0_i32 = arith.constant 0 : i32
    %c0_i32_0 = arith.constant 0 : i32
    %c0_i32_1 = arith.constant 0 : i32
    return %c0_i32, %c0_i32_0 : i32, i32
  }
  func.func @transform_11(%arg0: i32) -> (i32, i32) {
    %c0_i32 = arith.constant 0 : i32
    %c0_i32_0 = arith.constant 0 : i32
    %c0_i32_1 = arith.constant 0 : i32
    return %c0_i32, %c0_i32_0 : i32, i32
  }
  func.func @transform_12(%arg0: i32) -> (i32, i32) {
    %c0_i32 = arith.constant 0 : i32
    %c0_i32_0 = arith.constant 0 : i32
    %c0_i32_1 = arith.constant 0 : i32
    return %c0_i32, %c0_i32_0 : i32, i32
  }
  func.func @transform_13(%arg0: i32) -> (i32, i32) {
    %c0_i32 = arith.constant 0 : i32
    %c0_i32_0 = arith.constant 0 : i32
    return %arg0, %c0_i32 : i32, i32
  }
}

</mosaic_0001>

<llo_original>
// kernel: tpu_custom_call.1
$region0: #{tpu_custom_call.1}
  #allocation0 [shape = 'u32[]', space=smem, size = 0x4, offset = 0x4, fixed_abs, tag = 'smem constant byte address 0x4 - core index']
  #allocation1 [shape = 'u32[72,128]{1,0:T(1,128)}', space=vmem, size = 0x9000, scoped, tag = 'internal scratch']
  #allocation2 [shape = 'f32[1,1]{1,0:T(1,128)S(6)}', space=smem, size = 0x200, scoped, tag = 'scoped memory for tpu_custom_call.1']
  %s0 = inlined_call_operand.hbm [shape: f32[16,32], index: 0, kind: input, shape index: {}]
  %s1 = inlined_call_operand.hbm [shape: f32[16,32], index: 1, kind: input, shape index: {}]
  %s2 = inlined_call_operand.hbm [shape: f32[32,32], index: 2, kind: input, shape index: {}]
  %s3 = inlined_call_operand.vmem [shape: f32[1,32], index: 3, kind: input, shape index: {}]
  %s4 = inlined_call_operand.hbm [shape: f32[32,32], index: 4, kind: input, shape index: {}]
  %s5 = inlined_call_operand.vmem [shape: f32[1,32], index: 5, kind: input, shape index: {}]
  %s6 = inlined_call_operand.hbm [shape: f32[32,32], index: 6, kind: input, shape index: {}]
  %s7 = inlined_call_operand.hbm [shape: f32[32,32], index: 7, kind: input, shape index: {}]
  %s8 = inlined_call_operand.vmem [shape: f32[1,32], index: 8, kind: input, shape index: {}]
  %s9 = inlined_call_operand.hbm [shape: f32[32,32], index: 9, kind: input, shape index: {}]
  %s10 = inlined_call_operand.vmem [shape: f32[1,32], index: 10, kind: input, shape index: {}]
  %s11 = inlined_call_operand.vmem [shape: f32[1,32], index: 11, kind: input, shape index: {}]
  %s12 = inlined_call_operand.<no memory space> [shape: f32[1,1], index: 12, kind: input, shape index: {}]
  %s13 = inlined_call_operand.hbm [shape: f32[2,128], index: 13, kind: output, shape index: {}]
  %s14 = sld [smem:[#allocation0]]
  $region90: #{tpu_custom_call.1} parent=0
    _
  %s16 = ssub.s32 1, %s14
  %s17 = scalar_select 0, %s16, %s14
  %18 = sst [smem:[#allocation2]] %s12
  $region1: #{tpu_custom_call.1} parent=0
    #allocation3 [shape = 'u8[8192]{0}', space=vmem, size = 0x2000, scoped, tag = 'input window, operand 0, single buffered']
    #allocation4 [shape = 's32[1]{0}', space=sflag, size = 0x4, scoped, tag = 'scoped memory for tpu_custom_call.1']
    #allocation5 [shape = 's32[1]{0}', space=sflag, size = 0x4, scoped, tag = 'scoped memory for tpu_custom_call.1']
    #allocation6 [shape = 'u8[8192]{0}', space=vmem, size = 0x2000, scoped, tag = 'input window, operand 1, single buffered']
    #allocation7 [shape = 's32[1]{0}', space=sflag, size = 0x4, scoped, tag = 'scoped memory for tpu_custom_call.1']
    #allocation8 [shape = 'u8[16384]{0}', space=vmem, size = 0x4000, scoped, tag = 'input window, operand 2, single buffered']
    #allocation9 [shape = 'u8[16384]{0}', space=vmem, size = 0x4000, scoped, tag = 'input window, operand 4, single buffered']
    #allocation10 [shape = 's32[1]{0}', space=sflag, size = 0x4, scoped, tag = 'scoped memory for tpu_custom_call.1']
    #allocation11 [shape = 'u8[16384]{0}', space=vmem, size = 0x4000, scoped, tag = 'input window, operand 6, single buffered']
    #allocation12 [shape = 'u8[16384]{0}', space=vmem, size = 0x4000, scoped, tag = 'input window, operand 7, single buffered']
    #allocation13 [shape = 's32[1]{0}', space=sflag, size = 0x4, scoped, tag = 'scoped memory for tpu_custom_call.1']
    #allocation14 [shape = 'u8[16384]{0}', space=vmem, size = 0x4000, scoped, tag = 'input window, operand 9, single buffered']
    #allocation15 [shape = 'u8[1024]{0}', space=vmem, size = 0x400, scoped, tag = 'output window, operand 0, single buffered']
    %19 = vsyncpa [#allocation4], 0
    %20 = vsyncpa [#allocation7], 0
    %21 = vsyncpa [#allocation10], 0
    %22 = vsyncpa [#allocation13], 0
    %23 = vsyncpa [#allocation5], 0
    // Predicated region
    $region2: #{tpu_custom_call.1} parent=1 // pred_check
      _
    $region3: #{tpu_custom_call.1} parent=1 // pred_check_branch
      %25 = sbr.rel (0) target = $region5
    $region4: #{tpu_custom_call.1} parent=1 // pred_region
      %27 = vsyncadd [#allocation4], 0
      %s28 = sshll.u32 %s0, 4
      %s29 = int_to_ptr.hbm [resolvable:$true] %s28
      %s30 = sshll.u32 [#allocation3], 4
      %s31 = int_to_ptr.vmem [resolvable:$true] %s30
      %36 = dma.hbm_to_vmem [thread:$0]  %s29, 256, %s31, [#allocation4], 128, 128, 8
    $region5: #{tpu_custom_call.1} parent=1 // pred_fallthru
      _
    // Predicated region
    $region6: #{tpu_custom_call.1} parent=1 // pred_check
      _
    $region7: #{tpu_custom_call.1} parent=1 // pred_check_branch
      %38 = sbr.rel (0) target = $region9
    $region8: #{tpu_custom_call.1} parent=1 // pred_region
      %40 = vsyncadd [#allocation7], 0
      %s41 = sshll.u32 %s1, 4
      %s42 = int_to_ptr.hbm [resolvable:$true] %s41
      %s43 = sshll.u32 [#allocation6], 4
      %s44 = int_to_ptr.vmem [resolvable:$true] %s43
      %49 = dma.hbm_to_vmem [thread:$0]  %s42, 256, %s44, [#allocation7], 128, 128, 8
    $region9: #{tpu_custom_call.1} parent=1 // pred_fallthru
      _
    // Predicated region
    $region10: #{tpu_custom_call.1} parent=1 // pred_check
      _
    $region11: #{tpu_custom_call.1} parent=1 // pred_check_branch
      %51 = sbr.rel (0) target = $region13
    $region12: #{tpu_custom_call.1} parent=1 // pred_region
      %53 = vsyncadd [#allocation7], 0
      %s54 = sshll.u32 %s2, 4
      %s55 = int_to_ptr.hbm [resolvable:$true] %s54
      %s56 = sshll.u32 [#allocation8], 4
      %s57 = int_to_ptr.vmem [resolvable:$true] %s56
      %62 = dma.hbm_to_vmem [thread:$0]  %s55, 512, %s57, [#allocation7], 128, 128, 8
    $region13: #{tpu_custom_call.1} parent=1 // pred_fallthru
      _
    // Predicated region
    $region14: #{tpu_custom_call.1} parent=1 // pred_check
      _
    $region15: #{tpu_custom_call.1} parent=1 // pred_check_branch
      %64 = sbr.rel (0) target = $region17
    $region16: #{tpu_custom_call.1} parent=1 // pred_region
      _
    $region17: #{tpu_custom_call.1} parent=1 // pred_fallthru
      _
    // Predicated region
    $region18: #{tpu_custom_call.1} parent=1 // pred_check
      _
    $region19: #{tpu_custom_call.1} parent=1 // pred_check_branch
      %66 = sbr.rel (0) target = $region21
    $region20: #{tpu_custom_call.1} parent=1 // pred_region
      %68 = vsyncadd [#allocation10], 0
      %s69 = sshll.u32 %s4, 4
      %s70 = int_to_ptr.hbm [resolvable:$true] %s69
      %s71 = sshll.u32 [#allocation9], 4
      %s72 = int_to_ptr.vmem [resolvable:$true] %s71
      %77 = dma.hbm_to_vmem [thread:$0]  %s70, 512, %s72, [#allocation10], 128, 128, 8
    $region21: #{tpu_custom_call.1} parent=1 // pred_fallthru
      _
    // Predicated region
    $region22: #{tpu_custom_call.1} parent=1 // pred_check
      _
    $region23: #{tpu_custom_call.1} parent=1 // pred_check_branch
      %79 = sbr.rel (0) target = $region25
    $region24: #{tpu_custom_call.1} parent=1 // pred_region
      _
    $region25: #{tpu_custom_call.1} parent=1 // pred_fallthru
      _
    // Predicated region
    $region26: #{tpu_custom_call.1} parent=1 // pred_check
      _
    $region27: #{tpu_custom_call.1} parent=1 // pred_check_branch
      %81 = sbr.rel (0) target = $region29
    $region28: #{tpu_custom_call.1} parent=1 // pred_region
      %83 = vsyncadd [#allocation10], 0
      %s84 = sshll.u32 %s6, 4
      %s85 = int_to_ptr.hbm [resolvable:$true] %s84
      %s86 = sshll.u32 [#allocation11], 4
      %s87 = int_to_ptr.vmem [resolvable:$true] %s86
      %92 = dma.hbm_to_vmem [thread:$0]  %s85, 512, %s87, [#allocation10], 128, 128, 8
    $region29: #{tpu_custom_call.1} parent=1 // pred_fallthru
      _
    // Predicated region
    $region30: #{tpu_custom_call.1} parent=1 // pred_check
      _
    $region31: #{tpu_custom_call.1} parent=1 // pred_check_branch
      %94 = sbr.rel (0) target = $region33
    $region32: #{tpu_custom_call.1} parent=1 // pred_region
      %96 = vsyncadd [#allocation13], 0
      %s97 = sshll.u32 %s7, 4
      %s98 = int_to_ptr.hbm [resolvable:$true] %s97
      %s99 = sshll.u32 [#allocation12], 4
      %s100 = int_to_ptr.vmem [resolvable:$true] %s99
      %105 = dma.hbm_to_vmem [thread:$0]  %s98, 512, %s100, [#allocation13], 128, 128, 8
    $region33: #{tpu_custom_call.1} parent=1 // pred_fallthru
      _
    // Predicated region
    $region34: #{tpu_custom_call.1} parent=1 // pred_check
      _
    $region35: #{tpu_custom_call.1} parent=1 // pred_check_branch
      %107 = sbr.rel (0) target = $region37
    $region36: #{tpu_custom_call.1} parent=1 // pred_region
      _
    $region37: #{tpu_custom_call.1} parent=1 // pred_fallthru
      _
    // Predicated region
    $region38: #{tpu_custom_call.1} parent=1 // pred_check
      _
    $region39: #{tpu_custom_call.1} parent=1 // pred_check_branch
      %109 = sbr.rel (0) target = $region41
    $region40: #{tpu_custom_call.1} parent=1 // pred_region
      %111 = vsyncadd [#allocation13], 0
      %s112 = sshll.u32 %s9, 4
      %s113 = int_to_ptr.hbm [resolvable:$true] %s112
      %s114 = sshll.u32 [#allocation14], 4
      %s115 = int_to_ptr.vmem [resolvable:$true] %s114
      %120 = dma.hbm_to_vmem [thread:$0]  %s113, 512, %s115, [#allocation13], 128, 128, 8
    $region41: #{tpu_custom_call.1} parent=1 // pred_fallthru
      _
    // Predicated region
    $region42: #{tpu_custom_call.1} parent=1 // pred_check
      _
    $region43: #{tpu_custom_call.1} parent=1 // pred_check_branch
      %122 = sbr.rel (0) target = $region45
    $region44: #{tpu_custom_call.1} parent=1 // pred_region
      _
    $region45: #{tpu_custom_call.1} parent=1 // pred_fallthru
      _
    // Predicated region
    $region46: #{tpu_custom_call.1} parent=1 // pred_check
      _
    $region47: #{tpu_custom_call.1} parent=1 // pred_check_branch
      %124 = sbr.rel (0) target = $region49
    $region48: #{tpu_custom_call.1} parent=1 // pred_region
      _
    $region49: #{tpu_custom_call.1} parent=1 // pred_fallthru
      _
    // Predicated region
    $region50: #{tpu_custom_call.1} parent=1 // pred_check
      _
    $region51: #{tpu_custom_call.1} parent=1 // pred_check_branch
      %126 = sbr.rel (0) target = $region53
    $region52: #{tpu_custom_call.1} parent=1 // pred_region
      _
    $region53: #{tpu_custom_call.1} parent=1 // pred_fallthru
      _
    // Predicated region
    $region54: #{tpu_custom_call.1} parent=1 // pred_check
      _
    $region55: #{tpu_custom_call.1} parent=1 // pred_check_branch
      %128 = sbr.rel (0) target = $region57
    $region56: #{tpu_custom_call.1} parent=1 // pred_region
      %130 = dma.done [#allocation4], 256
    $region57: #{tpu_custom_call.1} parent=1 // pred_fallthru
      _
    // Predicated region
    $region58: #{tpu_custom_call.1} parent=1 // pred_check
      _
    $region59: #{tpu_custom_call.1} parent=1 // pred_check_branch
      %132 = sbr.rel (0) target = $region61
    $region60: #{tpu_custom_call.1} parent=1 // pred_region
      %134 = dma.done [#allocation7], 256
    $region61: #{tpu_custom_call.1} parent=1 // pred_fallthru
      _
    // Predicated region
    $region62: #{tpu_custom_call.1} parent=1 // pred_check
      _
    $region63: #{tpu_custom_call.1} parent=1 // pred_check_branch
      %136 = sbr.rel (0) target = $region65
    $region64: #{tpu_custom_call.1} parent=1 // pred_region
      %138 = dma.done [#allocation7], 512
    $region65: #{tpu_custom_call.1} parent=1 // pred_fallthru
      _
    // Predicated region
    $region66: #{tpu_custom_call.1} parent=1 // pred_check
      _
    $region67: #{tpu_custom_call.1} parent=1 // pred_check_branch
      %140 = sbr.rel (0) target = $region69
    $region68: #{tpu_custom_call.1} parent=1 // pred_region
      %142 = dma.done [#allocation10], 512
    $region69: #{tpu_custom_call.1} parent=1 // pred_fallthru
      _
    // Predicated region
    $region70: #{tpu_custom_call.1} parent=1 // pred_check
      _
    $region71: #{tpu_custom_call.1} parent=1 // pred_check_branch
      %144 = sbr.rel (0) target = $region73
    $region72: #{tpu_custom_call.1} parent=1 // pred_region
      %146 = dma.done [#allocation10], 512
    $region73: #{tpu_custom_call.1} parent=1 // pred_fallthru
      _
    // Predicated region
    $region74: #{tpu_custom_call.1} parent=1 // pred_check
      _
    $region75: #{tpu_custom_call.1} parent=1 // pred_check_branch
      %148 = sbr.rel (0) target = $region77
    $region76: #{tpu_custom_call.1} parent=1 // pred_region
      %150 = dma.done [#allocation13], 512
    $region77: #{tpu_custom_call.1} parent=1 // pred_fallthru
      _
    // Predicated region
    $region78: #{tpu_custom_call.1} parent=1 // pred_check
      _
    $region79: #{tpu_custom_call.1} parent=1 // pred_check_branch
      %152 = sbr.rel (0) target = $region81
    $region80: #{tpu_custom_call.1} parent=1 // pred_region
      %154 = dma.done [#allocation13], 512
    $region81: #{tpu_custom_call.1} parent=1 // pred_fallthru
      _
    %v155 = vld [vmem:[#allocation3] sm:$0xff]
    %v156 = vld [vmem:[#allocation3 + $0x8] sm:$0xff]
    %v157 = vld [vmem:[#allocation8] sm:$0xff]
    %v158 = vld [vmem:[#allocation8 + $0x8] sm:$0xff]
    %v159 = vld [vmem:[#allocation8 + $0x10] sm:$0xff]
    %v160 = vld [vmem:[#allocation8 + $0x18] sm:$0xff]
    %v161 = vld [vmem:[%s3] sm:$0x1]
    %v163 = vperm.slane %v161, 0
    %vm165 = vcmask 261120
    %v167 = vsel %vm165, %v155, 0
    %v170 = vsel %vm165, %v156, 0
    %172 = vmatpush.msra.mxu0 0.0
    %173 = vmatpush.msra.mxu0 0.0
    %174 = vmatpush.msra.mxu0 0.0
    %175 = vmatpush.msra.mxu0 0.0
    %176 = vmatpush.msra.mxu0 0.0
    %177 = vmatpush.msra.mxu0 0.0
    %178 = vmatpush.msra.mxu0 0.0
    %179 = vmatpush.msra.mxu0 0.0
    %180 = vmatpush.msra.mxu0 0.0
    %181 = vmatpush.msra.mxu0 0.0
    %182 = vmatpush.msra.mxu0 0.0
    %183 = vmatpush.msra.mxu0 0.0
    %184 = vmatpush.msra.mxu0 %v160
    %185 = vmatpush.msra.mxu0 %v159
    %186 = vmatpush.msra.mxu0 %v158
    %187 = vmatpush.msra.mxu0 %v157
    %188 = vmatmul.f32.gmra.mxu0 %v167
    %v189 = vpop.f32.mrf.mxu0
    %v190 = vadd.f32 %v163, %v189
    %191 = vmatmul.f32.gmra.mxu0 %v170
    %v192 = vpop.f32.mrf.mxu0
    %v193 = vadd.f32 %v163, %v192
    %194 = vdwg.mxu0
    %vm195 = vcmp.gt.f32.partialorder %v190, 0.0
    %vm196 = vcmp.gt.f32.partialorder %v193, 0.0
    %v197 = vmul.f32 %v190, 0.01
    %v198 = vmul.f32 %v193, 0.01
    %v199 = vsel %vm195, %v190, %v197
    %v200 = vsel %vm196, %v193, %v198
    %v201 = vld [vmem:[#allocation6] sm:$0xff]
    %v202 = vld [vmem:[#allocation6 + $0x8] sm:$0xff]
    %v203 = vld [vmem:[#allocation9] sm:$0xff]
    %v204 = vld [vmem:[#allocation9 + $0x8] sm:$0xff]
    %v205 = vld [vmem:[#allocation9 + $0x10] sm:$0xff]
    %v206 = vld [vmem:[#allocation9 + $0x18] sm:$0xff]
    %v207 = vld [vmem:[%s5] sm:$0x1]
    %v209 = vperm.slane %v207, 0
    %v212 = vsel %vm165, %v201, 0
    %v215 = vsel %vm165, %v202, 0
    %217 = vmatpush.msra.mxu0 0.0
    %218 = vmatpush.msra.mxu0 0.0
    %219 = vmatpush.msra.mxu0 0.0
    %220 = vmatpush.msra.mxu0 0.0
    %221 = vmatpush.msra.mxu0 0.0
    %222 = vmatpush.msra.mxu0 0.0
    %223 = vmatpush.msra.mxu0 0.0
    %224 = vmatpush.msra.mxu0 0.0
    %225 = vmatpush.msra.mxu0 0.0
    %226 = vmatpush.msra.mxu0 0.0
    %227 = vmatpush.msra.mxu0 0.0
    %228 = vmatpush.msra.mxu0 0.0
    %229 = vmatpush.msra.mxu0 %v206
    %230 = vmatpush.msra.mxu0 %v205
    %231 = vmatpush.msra.mxu0 %v204
    %232 = vmatpush.msra.mxu0 %v203
    %233 = vmatmul.f32.gmra.mxu0 %v212
    %v234 = vpop.f32.mrf.mxu0
    %v235 = vadd.f32 %v209, %v234
    %236 = vmatmul.f32.gmra.mxu0 %v215
    %v237 = vpop.f32.mrf.mxu0
    %v238 = vadd.f32 %v209, %v237
    %239 = vdwg.mxu0
    %vm240 = vcmp.gt.f32.partialorder %v235, 0.0
    %vm241 = vcmp.gt.f32.partialorder %v238, 0.0
    %v242 = vmul.f32 %v235, 0.01
    %v243 = vmul.f32 %v238, 0.01
    %v244 = vsel %vm240, %v235, %v242
    %v245 = vsel %vm241, %v238, %v243
    %v246 = vsel %vm165, %v199, 0.0
    %v247 = vrot.slane %v246, 4
    %v248 = vadd.f32 %v246, %v247
    %v249 = vrot.slane %v248, 2
    %v250 = vadd.f32 %v248, %v249
    %v251 = vrot.slane %v250, 1
    %v252 = vadd.f32 %v250, %v251
    %v253 = vsel %vm165, %v200, 0.0
    %v254 = vrot.slane %v253, 4
    %v255 = vadd.f32 %v253, %v254
    %v256 = vrot.slane %v255, 2
    %v257 = vadd.f32 %v255, %v256
    %v258 = vrot.slane %v257, 1
    %v259 = vadd.f32 %v257, %v258
    %v260 = vsel %vm165, %v244, 0.0
    %v261 = vrot.slane %v260, 4
    %v262 = vadd.f32 %v260, %v261
    %v263 = vrot.slane %v262, 2
    %v264 = vadd.f32 %v262, %v263
    %v265 = vrot.slane %v264, 1
    %v266 = vadd.f32 %v264, %v265
    %v267 = vsel %vm165, %v245, 0.0
    %v268 = vrot.slane %v267, 4
    %v269 = vadd.f32 %v267, %v268
    %v270 = vrot.slane %v269, 2
    %v271 = vadd.f32 %v269, %v270
    %v272 = vrot.slane %v271, 1
    %v273 = vadd.f32 %v271, %v272
    %v274 = vld [vmem:[#allocation11] sm:$0xff]
    %v275 = vld [vmem:[#allocation11 + $0x8] sm:$0xff]
    %v276 = vld [vmem:[#allocation11 + $0x10] sm:$0xff]
    %v277 = vld [vmem:[#allocation11 + $0x18] sm:$0xff]
    %v278 = vld [vmem:[#allocation12] sm:$0xff]
    %v279 = vld [vmem:[#allocation12 + $0x8] sm:$0xff]
    %v280 = vld [vmem:[#allocation12 + $0x10] sm:$0xff]
    %v281 = vld [vmem:[#allocation12 + $0x18] sm:$0xff]
    %vm284 = vcmask 1041409
    %v285 = vsel %vm284, %v273, %v266
    %v286 = vsel %vm165, %v285, 0
    %288 = vmatpush.msra.mxu0 0.0
    %289 = vmatpush.msra.mxu0 0.0
    %290 = vmatpush.msra.mxu0 0.0
    %291 = vmatpush.msra.mxu0 0.0
    %292 = vmatpush.msra.mxu0 0.0
    %293 = vmatpush.msra.mxu0 0.0
    %294 = vmatpush.msra.mxu0 0.0
    %295 = vmatpush.msra.mxu0 0.0
    %296 = vmatpush.msra.mxu0 0.0
    %297 = vmatpush.msra.mxu0 0.0
    %298 = vmatpush.msra.mxu0 0.0
    %299 = vmatpush.msra.mxu0 0.0
    %300 = vmatpush.msra.mxu0 %v281
    %301 = vmatpush.msra.mxu0 %v280
    %302 = vmatpush.msra.mxu0 %v279
    %303 = vmatpush.msra.mxu0 %v278
    %304 = vmatmul.f32.gmra.mxu0 %v286
    %v305 = vpop.f32.mrf.mxu0
    %v306 = vadd.f32 0.0, %v305
    %307 = vdwg.mxu0
    %v310 = vsel %vm284, %v259, %v252
    %v311 = vsel %vm165, %v310, 0
    %313 = vmatpush.msra.mxu0 0.0
    %314 = vmatpush.msra.mxu0 0.0
    %315 = vmatpush.msra.mxu0 0.0
    %316 = vmatpush.msra.mxu0 0.0
    %317 = vmatpush.msra.mxu0 0.0
    %318 = vmatpush.msra.mxu0 0.0
    %319 = vmatpush.msra.mxu0 0.0
    %320 = vmatpush.msra.mxu0 0.0
    %321 = vmatpush.msra.mxu0 0.0
    %322 = vmatpush.msra.mxu0 0.0
    %323 = vmatpush.msra.mxu0 0.0
    %324 = vmatpush.msra.mxu0 0.0
    %325 = vmatpush.msra.mxu0 %v277
    %326 = vmatpush.msra.mxu0 %v276
    %327 = vmatpush.msra.mxu0 %v275
    %328 = vmatpush.msra.mxu0 %v274
    %329 = vmatmul.f32.gmra.mxu0 %v311
    %v330 = vpop.f32.mrf.mxu0
    %v331 = vadd.f32 %v306, %v330
    %332 = vdwg.mxu0
    %v333 = vld [vmem:[%s8] sm:$0x1]
    %v335 = vperm.slane %v333, 0
    %v337 = vadd.f32 %v331, %v335
    %vm338 = vcmp.gt.f32.partialorder %v337, 0.0
    %v339 = vmul.f32 %v337, 0.01
    %v340 = vsel %vm338, %v337, %v339
    %v341 = vld [vmem:[#allocation14] sm:$0xff]
    %v342 = vld [vmem:[#allocation14 + $0x8] sm:$0xff]
    %v343 = vld [vmem:[#allocation14 + $0x10] sm:$0xff]
    %v344 = vld [vmem:[#allocation14 + $0x18] sm:$0xff]
    %v345 = vld [vmem:[%s10] sm:$0x1]
    %v347 = vperm.slane %v345, 0
    %v350 = vsel %vm165, %v340, 0
    %352 = vmatpush.msra.mxu0 0.0
    %353 = vmatpush.msra.mxu0 0.0
    %354 = vmatpush.msra.mxu0 0.0
    %355 = vmatpush.msra.mxu0 0.0
    %356 = vmatpush.msra.mxu0 0.0
    %357 = vmatpush.msra.mxu0 0.0
    %358 = vmatpush.msra.mxu0 0.0
    %359 = vmatpush.msra.mxu0 0.0
    %360 = vmatpush.msra.mxu0 0.0
    %361 = vmatpush.msra.mxu0 0.0
    %362 = vmatpush.msra.mxu0 0.0
    %363 = vmatpush.msra.mxu0 0.0
    %364 = vmatpush.msra.mxu0 %v344
    %365 = vmatpush.msra.mxu0 %v343
    %366 = vmatpush.msra.mxu0 %v342
    %367 = vmatpush.msra.mxu0 %v341
    %368 = vmatmul.f32.gmra.mxu0 %v350
    %v369 = vpop.f32.mrf.mxu0
    %v370 = vadd.f32 %v347, %v369
    %371 = vdwg.mxu0
    %vm372 = vcmp.gt.f32.partialorder %v370, 0.0
    %v373 = vmul.f32 %v370, 0.01
    %v374 = vsel %vm372, %v370, %v373
    %v375 = vld [vmem:[%s11] sm:$0x1]
    %v377 = vperm.slane %v375, 0
    %v379 = vmul.f32 %v374, %v377
    %vm380 = vcmask 254976
    %v381 = vsel %vm380, %v379, 0.0
    %382 = vadd.xlane.f32.xlu0 %v381
    %v383 = vpop.xlane.xlu0 %382
    %s384 = sld [smem:[#allocation2]]
    %v385 = vstv %s384
    %v386 = vadd.f32 %v383, %v385
    %387 = vst [vmem:[#allocation15] sm:$0x3] %v386
    // Predicated region
    $region82: #{tpu_custom_call.1} parent=1 // pred_check
      _
    $region83: #{tpu_custom_call.1} parent=1 // pred_check_branch
      %389 = sbr.rel (0) target = $region85
    $region84: #{tpu_custom_call.1} parent=1 // pred_region
      %391 = vsyncadd [#allocation5], 0
      %s393 = sshll.u32 [#allocation15], 4
      %s394 = int_to_ptr.vmem [resolvable:$true] %s393
      %s395 = sshll.u32 %s13, 4
      %s396 = int_to_ptr.hbm [resolvable:$true] %s395
      %398 = dma.vmem_to_hbm [thread:$0]  %s394, 32, %s396, [#allocation5]
    $region85: #{tpu_custom_call.1} parent=1 // pred_fallthru
      _
    // Predicated region
    $region86: #{tpu_custom_call.1} parent=1 // pred_check
      _
    $region87: #{tpu_custom_call.1} parent=1 // pred_check_branch
      %400 = sbr.rel (0) target = $region89
    $region88: #{tpu_custom_call.1} parent=1 // pred_region
      %402 = dma.done [#allocation5], 32
    $region89: #{tpu_custom_call.1} parent=1 // pred_fallthru
      _
    %403 = vsyncpa [#allocation4], 1
    %404 = vsyncpa [#allocation7], 1
    %405 = vsyncpa [#allocation10], 1
    %406 = vsyncpa [#allocation13], 1
    %407 = vsyncpa [#allocation5], 1

</llo_original>
